<compile_context>
chip_gen: v7x
topology: tpu7x:2x2x1
jax: 0.10.0
libtpu: 0.0.40
codegen_flags: <defaults>
</compile_context>

<pallas_src>
import functools

import jax
import jax.numpy as jnp
from jax.experimental import pallas as pl
from jax.experimental.pallas import tpu as pltpu

LANES = 128            # vreg lane width; batch elements map onto lanes
SUBLANES = 8           # f32 sublane granularity; row counts padded to this
HIDDEN = 8             # hidden width of the MLP (statically unrolled)
# 8192 x 128 x 4 B = 4 MiB per f32 block; in + out double-buffered = 16 MiB,
# within the scoped-VMEM default on v5e/v6e/v7x.
DEFAULT_TILE_ROWS = 8192


def _round_up(a, b):
    return ((a + b - 1) // b) * b


def _mlp_kernel(params_ref, x_ref, o_ref, *, compute_dtype):
    # params_ref: SMEM f32[25] = [w1[0..7], b1[0..7], w2[0..7], b2]
    # x_ref/o_ref: VMEM [tr, 128] lane-dense batch tile (caller dtype).
    x = x_ref[...].astype(compute_dtype)
    # Fold b2 into the accumulator init (drops one full-vreg VPU add per tile).
    acc = jnp.full(x.shape, params_ref[3 * HIDDEN], dtype=jnp.float32)
    # Statically unrolled over the 8 hidden units: pure VPU FMAs + EUP tanh.
    for j in range(HIDDEN):
        w1j = params_ref[j].astype(compute_dtype)
        b1j = params_ref[HIDDEN + j].astype(compute_dtype)
        w2j = params_ref[2 * HIDDEN + j].astype(compute_dtype)
        h = x * w1j + b1j                    # Linear(1, 8), column j
        acc = acc + jnp.tanh(h) * w2j        # Tanh + Linear(8, 1), f32 accum
    o_ref[...] = acc.astype(o_ref.dtype)


def self_sub_module(x, w1, b1, w2, b2, *, tile_rows=DEFAULT_TILE_ROWS,
                    compute_dtype=jnp.float32, core_parallel=False):
    """Pallas forward of Linear(1,8) -> Tanh -> Linear(8,1).

    x: (N, 1); w1: (8, 1); b1: (8,); w2: (1, 8); b2: (1,)  ->  (N, 1)
    """
    n = x.shape[0]
    out_dtype = x.dtype

    # 25 scalar parameters -> one SMEM vector via scalar prefetch.
    params = jnp.concatenate(
        [w1.reshape(HIDDEN), b1.reshape(HIDDEN), w2.reshape(HIDDEN), b2.reshape(1)]
    ).astype(jnp.float32)

    # Lane-dense layout: pad only to the 128-lane / 8-sublane boundary
    # (< 1024 extra elements), never to a whole tile.
    tile_rows = max(SUBLANES, _round_up(int(tile_rows), SUBLANES))
    rows = pl.cdiv(n, LANES)
    rows_padded = _round_up(rows, SUBLANES)
    padded_n = rows_padded * LANES

    # Balance block sizes so the ragged last block is never mostly wasted
    # compute (e.g. rows just above one tile); blocks stay <= tile_rows and
    # within one sublane-group of each other.
    num_blocks = pl.cdiv(rows_padded, tile_rows)
    tr = _round_up(pl.cdiv(rows_padded, num_blocks), SUBLANES)
    grid = pl.cdiv(rows_padded, tr)

    x_flat = x.reshape(n)                    # caller dtype; cast happens in-kernel
    if padded_n != n:                        # skip the pad pass for aligned N
        x_flat = jnp.pad(x_flat, (0, padded_n - n))
    x2d = x_flat.reshape(rows_padded, LANES)

    # TODO(synk): on v7x, core_parallel=True (pltpu.CORE_PARALLEL) splits the
    # row axis across both TensorCores (~2x on this EUP-bound kernel); plain
    # PARALLEL is the safe default for single-TC v5e/v6e.
    row_sem = pltpu.CORE_PARALLEL if core_parallel else pltpu.PARALLEL

    out2d = pl.pallas_call(
        functools.partial(_mlp_kernel, compute_dtype=compute_dtype),
        out_shape=jax.ShapeDtypeStruct((rows_padded, LANES), out_dtype),
        grid_spec=pltpu.PrefetchScalarGridSpec(
            num_scalar_prefetch=1,
            grid=(grid,),
            in_specs=[pl.BlockSpec((tr, LANES), lambda i, p: (i, 0))],
            out_specs=pl.BlockSpec((tr, LANES), lambda i, p: (i, 0)),
        ),
        compiler_params=pltpu.CompilerParams(
            dimension_semantics=(row_sem,),
        ),
    )(params, x2d)

    out_flat = out2d.reshape(padded_n)       # already in the caller's dtype
    if padded_n != n:                        # skip the slice pass for aligned N
        out_flat = out_flat[:n]
    return out_flat.reshape(n, 1)


def self_sub_module_ref(x, w1, b1, w2, b2):
    h = x @ w1.T + b1
    a = jnp.tanh(h)
    return a @ w2.T + b2


if __name__ == "__main__":
    key = jax.random.PRNGKey(0)
    kx, k1, k2, k3, k4 = jax.random.split(key, 5)

    # Deterministic parameter init (PyTorch-style uniform ranges).
    w1 = jax.random.uniform(k1, (8, 1), jnp.float32, -1.0, 1.0)        # Linear(1, 8).weight
    b1 = jax.random.uniform(k2, (8,), jnp.float32, -1.0, 1.0)          # Linear(1, 8).bias
    bound2 = 1.0 / jnp.sqrt(8.0)
    w2 = jax.random.uniform(k3, (1, 8), jnp.float32, -bound2, bound2)  # Linear(8, 1).weight
    b2 = jax.random.uniform(k4, (1,), jnp.float32, -bound2, bound2)    # Linear(8, 1).bias

    # 1) Small batch of scalar samples (Linear in_features=1), single block.
    N = 8
    x = jax.random.normal(kx, (N, 1), dtype=jnp.float32)
    y = self_sub_module(x, w1, b1, w2, b2)
    jax.block_until_ready(y)
    y_ref = self_sub_module_ref(x, w1, b1, w2, b2)
    assert y.shape == (N, 1), y.shape
    assert jnp.allclose(y, y_ref, atol=1e-5, rtol=1e-5), (y, y_ref)

    # 2) Unaligned N (exercises the lane/sublane pad + tail slice path).
    N2 = 1000
    x2 = jax.random.normal(kx, (N2, 1), dtype=jnp.float32)
    y2 = self_sub_module(x2, w1, b1, w2, b2)
    jax.block_until_ready(y2)
    y2_ref = self_sub_module_ref(x2, w1, b1, w2, b2)
    assert y2.shape == (N2, 1), y2.shape
    assert jnp.allclose(y2, y2_ref, atol=1e-5, rtol=1e-5)

    # 3) Multi-block grid with a ragged last block (small tile_rows forces it).
    N3 = 5000
    x3 = jax.random.normal(kx, (N3, 1), dtype=jnp.float32)
    y3 = self_sub_module(x3, w1, b1, w2, b2, tile_rows=16)
    jax.block_until_ready(y3)
    y3_ref = self_sub_module_ref(x3, w1, b1, w2, b2)
    assert y3.shape == (N3, 1), y3.shape
    assert jnp.allclose(y3, y3_ref, atol=1e-5, rtol=1e-5)

    print("KERNEL_OK")
</pallas_src>

<mosaic_0001>
module attributes {stable_mosaic.version = 11 : i64} {
  func.func @_mlp_kernel(%arg0: i32, %arg1: memref<25xf32, #tpu.memory_space<smem>>, %arg2: memref<8x128xf32, #tpu.memory_space<vmem>>, %arg3: memref<8x128xf32, #tpu.memory_space<vmem>>) attributes {dimension_semantics = [#tpu.dimension_semantics<parallel>], iteration_bounds = array<i64: 1>, scalar_prefetch = 1 : i64, scratch_operands = 0 : i64, tpu.core_type = #tpu.core_type<tc>, window_params = [{transform_indices = @transform_0, window_bounds = array<i64: 8, 128>}, {transform_indices = @transform_1, window_bounds = array<i64: 8, 128>}]} {
    %c0 = arith.constant 0 : index
    %c0_0 = arith.constant 0 : index
    %0 = vector.load %arg2[%c0, %c0_0] : memref<8x128xf32, #tpu.memory_space<vmem>>, vector<8x128xf32>
    %c24 = arith.constant 24 : index
    %1 = memref.load %arg1[%c24] : memref<25xf32, #tpu.memory_space<smem>>
    %2 = vector.broadcast %1 : f32 to vector<8x128xf32>
    %c0_1 = arith.constant 0 : index
    %3 = memref.load %arg1[%c0_1] : memref<25xf32, #tpu.memory_space<smem>>
    %c8 = arith.constant 8 : index
    %4 = memref.load %arg1[%c8] : memref<25xf32, #tpu.memory_space<smem>>
    %c16 = arith.constant 16 : index
    %5 = memref.load %arg1[%c16] : memref<25xf32, #tpu.memory_space<smem>>
    %6 = vector.broadcast %3 : f32 to vector<8x128xf32>
    %7 = arith.mulf %0, %6 : vector<8x128xf32>
    %8 = vector.broadcast %4 : f32 to vector<8x128xf32>
    %9 = arith.addf %7, %8 : vector<8x128xf32>
    %10 = math.tanh %9 : vector<8x128xf32>
    %11 = vector.broadcast %5 : f32 to vector<8x128xf32>
    %12 = arith.mulf %10, %11 : vector<8x128xf32>
    %13 = arith.addf %2, %12 : vector<8x128xf32>
    %c1 = arith.constant 1 : index
    %14 = memref.load %arg1[%c1] : memref<25xf32, #tpu.memory_space<smem>>
    %c9 = arith.constant 9 : index
    %15 = memref.load %arg1[%c9] : memref<25xf32, #tpu.memory_space<smem>>
    %c17 = arith.constant 17 : index
    %16 = memref.load %arg1[%c17] : memref<25xf32, #tpu.memory_space<smem>>
    %17 = vector.broadcast %14 : f32 to vector<8x128xf32>
    %18 = arith.mulf %0, %17 : vector<8x128xf32>
    %19 = vector.broadcast %15 : f32 to vector<8x128xf32>
    %20 = arith.addf %18, %19 : vector<8x128xf32>
    %21 = math.tanh %20 : vector<8x128xf32>
    %22 = vector.broadcast %16 : f32 to vector<8x128xf32>
    %23 = arith.mulf %21, %22 : vector<8x128xf32>
    %24 = arith.addf %13, %23 : vector<8x128xf32>
    %c2 = arith.constant 2 : index
    %25 = memref.load %arg1[%c2] : memref<25xf32, #tpu.memory_space<smem>>
    %c10 = arith.constant 10 : index
    %26 = memref.load %arg1[%c10] : memref<25xf32, #tpu.memory_space<smem>>
    %c18 = arith.constant 18 : index
    %27 = memref.load %arg1[%c18] : memref<25xf32, #tpu.memory_space<smem>>
    %28 = vector.broadcast %25 : f32 to vector<8x128xf32>
    %29 = arith.mulf %0, %28 : vector<8x128xf32>
    %30 = vector.broadcast %26 : f32 to vector<8x128xf32>
    %31 = arith.addf %29, %30 : vector<8x128xf32>
    %32 = math.tanh %31 : vector<8x128xf32>
    %33 = vector.broadcast %27 : f32 to vector<8x128xf32>
    %34 = arith.mulf %32, %33 : vector<8x128xf32>
    %35 = arith.addf %24, %34 : vector<8x128xf32>
    %c3 = arith.constant 3 : index
    %36 = memref.load %arg1[%c3] : memref<25xf32, #tpu.memory_space<smem>>
    %c11 = arith.constant 11 : index
    %37 = memref.load %arg1[%c11] : memref<25xf32, #tpu.memory_space<smem>>
    %c19 = arith.constant 19 : index
    %38 = memref.load %arg1[%c19] : memref<25xf32, #tpu.memory_space<smem>>
    %39 = vector.broadcast %36 : f32 to vector<8x128xf32>
    %40 = arith.mulf %0, %39 : vector<8x128xf32>
    %41 = vector.broadcast %37 : f32 to vector<8x128xf32>
    %42 = arith.addf %40, %41 : vector<8x128xf32>
    %43 = math.tanh %42 : vector<8x128xf32>
    %44 = vector.broadcast %38 : f32 to vector<8x128xf32>
    %45 = arith.mulf %43, %44 : vector<8x128xf32>
    %46 = arith.addf %35, %45 : vector<8x128xf32>
    %c4 = arith.constant 4 : index
    %47 = memref.load %arg1[%c4] : memref<25xf32, #tpu.memory_space<smem>>
    %c12 = arith.constant 12 : index
    %48 = memref.load %arg1[%c12] : memref<25xf32, #tpu.memory_space<smem>>
    %c20 = arith.constant 20 : index
    %49 = memref.load %arg1[%c20] : memref<25xf32, #tpu.memory_space<smem>>
    %50 = vector.broadcast %47 : f32 to vector<8x128xf32>
    %51 = arith.mulf %0, %50 : vector<8x128xf32>
    %52 = vector.broadcast %48 : f32 to vector<8x128xf32>
    %53 = arith.addf %51, %52 : vector<8x128xf32>
    %54 = math.tanh %53 : vector<8x128xf32>
    %55 = vector.broadcast %49 : f32 to vector<8x128xf32>
    %56 = arith.mulf %54, %55 : vector<8x128xf32>
    %57 = arith.addf %46, %56 : vector<8x128xf32>
    %c5 = arith.constant 5 : index
    %58 = memref.load %arg1[%c5] : memref<25xf32, #tpu.memory_space<smem>>
    %c13 = arith.constant 13 : index
    %59 = memref.load %arg1[%c13] : memref<25xf32, #tpu.memory_space<smem>>
    %c21 = arith.constant 21 : index
    %60 = memref.load %arg1[%c21] : memref<25xf32, #tpu.memory_space<smem>>
    %61 = vector.broadcast %58 : f32 to vector<8x128xf32>
    %62 = arith.mulf %0, %61 : vector<8x128xf32>
    %63 = vector.broadcast %59 : f32 to vector<8x128xf32>
    %64 = arith.addf %62, %63 : vector<8x128xf32>
    %65 = math.tanh %64 : vector<8x128xf32>
    %66 = vector.broadcast %60 : f32 to vector<8x128xf32>
    %67 = arith.mulf %65, %66 : vector<8x128xf32>
    %68 = arith.addf %57, %67 : vector<8x128xf32>
    %c6 = arith.constant 6 : index
    %69 = memref.load %arg1[%c6] : memref<25xf32, #tpu.memory_space<smem>>
    %c14 = arith.constant 14 : index
    %70 = memref.load %arg1[%c14] : memref<25xf32, #tpu.memory_space<smem>>
    %c22 = arith.constant 22 : index
    %71 = memref.load %arg1[%c22] : memref<25xf32, #tpu.memory_space<smem>>
    %72 = vector.broadcast %69 : f32 to vector<8x128xf32>
    %73 = arith.mulf %0, %72 : vector<8x128xf32>
    %74 = vector.broadcast %70 : f32 to vector<8x128xf32>
    %75 = arith.addf %73, %74 : vector<8x128xf32>
    %76 = math.tanh %75 : vector<8x128xf32>
    %77 = vector.broadcast %71 : f32 to vector<8x128xf32>
    %78 = arith.mulf %76, %77 : vector<8x128xf32>
    %79 = arith.addf %68, %78 : vector<8x128xf32>
    %c7 = arith.constant 7 : index
    %80 = memref.load %arg1[%c7] : memref<25xf32, #tpu.memory_space<smem>>
    %c15 = arith.constant 15 : index
    %81 = memref.load %arg1[%c15] : memref<25xf32, #tpu.memory_space<smem>>
    %c23 = arith.constant 23 : index
    %82 = memref.load %arg1[%c23] : memref<25xf32, #tpu.memory_space<smem>>
    %83 = vector.broadcast %80 : f32 to vector<8x128xf32>
    %84 = arith.mulf %0, %83 : vector<8x128xf32>
    %85 = vector.broadcast %81 : f32 to vector<8x128xf32>
    %86 = arith.addf %84, %85 : vector<8x128xf32>
    %87 = math.tanh %86 : vector<8x128xf32>
    %88 = vector.broadcast %82 : f32 to vector<8x128xf32>
    %89 = arith.mulf %87, %88 : vector<8x128xf32>
    %90 = arith.addf %79, %89 : vector<8x128xf32>
    %c0_2 = arith.constant 0 : index
    %c0_3 = arith.constant 0 : index
    %91 = vector.load %arg3[%c0_2, %c0_3] : memref<8x128xf32, #tpu.memory_space<vmem>>, vector<8x128xf32>
    tpu.vector_store %arg3[%c0_2, %c0_3], %90 {strides = array<i32>} : memref<8x128xf32, #tpu.memory_space<vmem>>, vector<8x128xf32>,
    return
  }
  func.func @transform_0(%arg0: i32, %arg1: memref<25xf32, #tpu.memory_space<smem>>) -> (i32, i32) {
    %c0_i32 = arith.constant 0 : i32
    %c0_i32_0 = arith.constant 0 : i32
    return %arg0, %c0_i32 : i32, i32
  }
  func.func @transform_1(%arg0: i32, %arg1: memref<25xf32, #tpu.memory_space<smem>>) -> (i32, i32) {
    %c0_i32 = arith.constant 0 : i32
    %c0_i32_0 = arith.constant 0 : i32
    return %arg0, %c0_i32 : i32, i32
  }
}

</mosaic_0001>

<llo_original>
// kernel: tpu_custom_call.1
$region0: #{tpu_custom_call.1}
  #allocation0 [shape = 'u32[]', space=smem, size = 0x4, offset = 0x4, fixed_abs, tag = 'smem constant byte address 0x4 - core index']
  #allocation1 [shape = 'u32[144,128]{1,0:T(1,128)}', space=vmem, size = 0x12000, scoped, tag = 'internal scratch']
  #allocation2 [shape = 's32[1]{0}', space=sflag, size = 0x4, scoped, tag = 'scoped memory for tpu_custom_call.1']
  #allocation3 [shape = 'u8[512]{0}', space=smem, size = 0x200, scoped, tag = 'prefetched SMEM operand 0']
  %s0 = inlined_call_operand.hbm [shape: f32[25], index: 0, kind: input, shape index: {}]
  %s1 = inlined_call_operand.hbm [shape: f32[8,128], index: 1, kind: input, shape index: {}]
  %s2 = inlined_call_operand.hbm [shape: f32[8,128], index: 2, kind: output, shape index: {}]
  %s3 = sld [smem:[#allocation0]]
  $region18: #{tpu_custom_call.1} parent=0
    _
  %s5 = ssub.s32 1, %s3
  %s6 = scalar_select 0, %s5, %s3
  %8 = dma.hbm_to_smem %s0, 16, [#allocation3], [#allocation2]
  %9 = dma.done [#allocation2], 16
  %10 = sfence
  $region1: #{tpu_custom_call.1} parent=0
    #allocation4 [shape = 'u8[4096]{0}', space=vmem, size = 0x1000, scoped, tag = 'input window, operand 1, single buffered']
    #allocation5 [shape = 's32[1]{0}', space=sflag, size = 0x4, scoped, tag = 'scoped memory for tpu_custom_call.1']
    #allocation6 [shape = 's32[1]{0}', space=sflag, size = 0x4, scoped, tag = 'scoped memory for tpu_custom_call.1']
    #allocation7 [shape = 'u8[4096]{0}', space=vmem, size = 0x1000, scoped, tag = 'output window, operand 0, single buffered']
    %11 = vsyncpa [#allocation5], 0
    %12 = vsyncpa [#allocation6], 0
    // Predicated region
    $region2: #{tpu_custom_call.1} parent=1 // pred_check
      _
    $region3: #{tpu_custom_call.1} parent=1 // pred_check_branch
      %14 = sbr.rel (0) target = $region5
    $region4: #{tpu_custom_call.1} parent=1 // pred_region
      %s16 = ssub.s32 128, 128
      %17 = vsyncadd [#allocation5], %s16
      %s19 = sshll.u32 [#allocation4], 4
      %s20 = int_to_ptr.vmem [resolvable:$true] %s19
      %22 = dma.hbm_to_vmem [thread:$0]  %s1, 128, %s20, [#allocation5]
    $region5: #{tpu_custom_call.1} parent=1 // pred_fallthru
      _
    // Predicated region
    $region6: #{tpu_custom_call.1} parent=1 // pred_check
      _
    $region7: #{tpu_custom_call.1} parent=1 // pred_check_branch
      %24 = sbr.rel (0) target = $region9
    $region8: #{tpu_custom_call.1} parent=1 // pred_region
      %25 = dma.done [#allocation5], 128
    $region9: #{tpu_custom_call.1} parent=1 // pred_fallthru
      _
    %v26 = vld [vmem:[#allocation4] sm:$0xff]
    %s27 = sld [smem:[#allocation3 + $0x18]]
    %v28 = vstv %s27
    %s29 = sld [smem:[#allocation3]]
    %s30 = sld [smem:[#allocation3 + $0x8]]
    %s31 = sld [smem:[#allocation3 + $0x10]]
    %v32 = vstv %s29
    %v33 = vmul.f32 %v26, %v32
    %v34 = vstv %s30
    %v35 = vadd.f32 %v33, %v34
    %v36 = vtanh.pop %v35
    %v37 = vstv %s31
    %v38 = vmul.f32 %v36, %v37
    %v39 = vadd.f32 %v28, %v38
    %s40 = sld [smem:[#allocation3 + $0x1]]
    %s41 = sld [smem:[#allocation3 + $0x9]]
    %s42 = sld [smem:[#allocation3 + $0x11]]
    %v43 = vstv %s40
    %v44 = vmul.f32 %v26, %v43
    %v45 = vstv %s41
    %v46 = vadd.f32 %v44, %v45
    %v47 = vtanh.pop %v46
    %v48 = vstv %s42
    %v49 = vmul.f32 %v47, %v48
    %v50 = vadd.f32 %v39, %v49
    %s51 = sld [smem:[#allocation3 + $0x2]]
    %s52 = sld [smem:[#allocation3 + $0xa]]
    %s53 = sld [smem:[#allocation3 + $0x12]]
    %v54 = vstv %s51
    %v55 = vmul.f32 %v26, %v54
    %v56 = vstv %s52
    %v57 = vadd.f32 %v55, %v56
    %v58 = vtanh.pop %v57
    %v59 = vstv %s53
    %v60 = vmul.f32 %v58, %v59
    %v61 = vadd.f32 %v50, %v60
    %s62 = sld [smem:[#allocation3 + $0x3]]
    %s63 = sld [smem:[#allocation3 + $0xb]]
    %s64 = sld [smem:[#allocation3 + $0x13]]
    %v65 = vstv %s62
    %v66 = vmul.f32 %v26, %v65
    %v67 = vstv %s63
    %v68 = vadd.f32 %v66, %v67
    %v69 = vtanh.pop %v68
    %v70 = vstv %s64
    %v71 = vmul.f32 %v69, %v70
    %v72 = vadd.f32 %v61, %v71
    %s73 = sld [smem:[#allocation3 + $0x4]]
    %s74 = sld [smem:[#allocation3 + $0xc]]
    %s75 = sld [smem:[#allocation3 + $0x14]]
    %v76 = vstv %s73
    %v77 = vmul.f32 %v26, %v76
    %v78 = vstv %s74
    %v79 = vadd.f32 %v77, %v78
    %v80 = vtanh.pop %v79
    %v81 = vstv %s75
    %v82 = vmul.f32 %v80, %v81
    %v83 = vadd.f32 %v72, %v82
    %s84 = sld [smem:[#allocation3 + $0x5]]
    %s85 = sld [smem:[#allocation3 + $0xd]]
    %s86 = sld [smem:[#allocation3 + $0x15]]
    %v87 = vstv %s84
    %v88 = vmul.f32 %v26, %v87
    %v89 = vstv %s85
    %v90 = vadd.f32 %v88, %v89
    %v91 = vtanh.pop %v90
    %v92 = vstv %s86
    %v93 = vmul.f32 %v91, %v92
    %v94 = vadd.f32 %v83, %v93
    %s95 = sld [smem:[#allocation3 + $0x6]]
    %s96 = sld [smem:[#allocation3 + $0xe]]
    %s97 = sld [smem:[#allocation3 + $0x16]]
    %v98 = vstv %s95
    %v99 = vmul.f32 %v26, %v98
    %v100 = vstv %s96
    %v101 = vadd.f32 %v99, %v100
    %v102 = vtanh.pop %v101
    %v103 = vstv %s97
    %v104 = vmul.f32 %v102, %v103
    %v105 = vadd.f32 %v94, %v104
    %s106 = sld [smem:[#allocation3 + $0x7]]
    %s107 = sld [smem:[#allocation3 + $0xf]]
    %s108 = sld [smem:[#allocation3 + $0x17]]
    %v109 = vstv %s106
    %v110 = vmul.f32 %v26, %v109
    %v111 = vstv %s107
    %v112 = vadd.f32 %v110, %v111
    %v113 = vtanh.pop %v112
    %v114 = vstv %s108
    %v115 = vmul.f32 %v113, %v114
    %v116 = vadd.f32 %v105, %v115
    %117 = vst [vmem:[#allocation7] sm:$0xff] %v116
    // Predicated region
    $region10: #{tpu_custom_call.1} parent=1 // pred_check
      _
    $region11: #{tpu_custom_call.1} parent=1 // pred_check_branch
      %119 = sbr.rel (0) target = $region13
    $region12: #{tpu_custom_call.1} parent=1 // pred_region
      %s121 = ssub.s32 128, 128
      %122 = vsyncadd [#allocation6], %s121
      %s124 = sshll.u32 [#allocation7], 4
      %s125 = int_to_ptr.vmem [resolvable:$true] %s124
      %127 = dma.vmem_to_hbm [thread:$0]  %s125, 128, %s2, [#allocation6]
    $region13: #{tpu_custom_call.1} parent=1 // pred_fallthru
      _
    // Predicated region
    $region14: #{tpu_custom_call.1} parent=1 // pred_check
      _
    $region15: #{tpu_custom_call.1} parent=1 // pred_check_branch
      %129 = sbr.rel (0) target = $region17
    $region16: #{tpu_custom_call.1} parent=1 // pred_region
      %130 = dma.done [#allocation6], 128
    $region17: #{tpu_custom_call.1} parent=1 // pred_fallthru
      _
    %131 = vsyncpa [#allocation5], 1
    %132 = vsyncpa [#allocation6], 1

</llo_original>
